<compile_context>
chip_gen: v5e
topology: v5e:2x2
jax: 0.10.0
libtpu: 0.0.40
codegen_flags: <defaults>
</compile_context>

<pallas_src>
import functools

import numpy as np
import jax
import jax.numpy as jnp
from jax.experimental import pallas as pl
from jax.experimental.pallas import tpu as pltpu


def _round_up(a, b):
    return (a + b - 1) // b * b


# ----------------------------------------------------------------------------
# Pallas kernels
# ----------------------------------------------------------------------------
def _matmul_bn_kernel(x_ref, w_ref, s_ref, b_ref, o_ref, acc_ref, *, relu):
    """Tiled matmul with f32 accumulator; fused BN affine (+ReLU) epilogue."""
    @pl.when(pl.program_id(2) == 0)
    def _init():
        acc_ref[...] = jnp.zeros_like(acc_ref)

    acc_ref[...] += jnp.dot(x_ref[...], w_ref[...],
                            preferred_element_type=jnp.float32)

    @pl.when(pl.program_id(2) == pl.num_programs(2) - 1)
    def _finalize():
        y = acc_ref[...] * s_ref[...] + b_ref[...]
        if relu:
            y = jnp.maximum(y, 0.0)
        o_ref[...] = y.astype(o_ref.dtype)


def _gap_conv_kernel(x_ref, w_ref, s_ref, b_ref, o_ref):
    """Fused AdaptiveAvgPool2d(1) + 1x1 conv + BN + ReLU (ASPP pooling branch)."""
    m = jnp.mean(x_ref[0], axis=0, keepdims=True)              # (1, Cin)  f32
    y = jnp.dot(m.astype(jnp.bfloat16), w_ref[...],
                preferred_element_type=jnp.float32)             # (1, Np)
    y = y * s_ref[...] + b_ref[...]
    y = jnp.maximum(y, 0.0)
    o_ref[0] = y


# ----------------------------------------------------------------------------
# Pallas wrappers
# ----------------------------------------------------------------------------
def pallas_matmul(x, w, scale=None, shift=None, relu=False):
    """out = relu((X @ W) * scale + shift), tiled Pallas matmul (bf16 MXU, f32 acc).

    N (and K if tiled) are padded to lane-dense multiples of 128; padding is
    sliced off before returning.
    """
    M, K = x.shape
    Kw, N = w.shape
    assert K == Kw

    # ---- lane-dense output channels ----
    Np = _round_up(N, 128)
    bn = 256 if (Np % 256 == 0 and Np >= 256) else 128

    # ---- K tiling (only for large K) ----
    if K <= 1024:
        Kp, bk = K, K
    else:
        bk = 512
        Kp = _round_up(K, bk)

    # ---- M tiling ----
    bm = _round_up(M, 8) if M <= 512 else 256
    Mp = _round_up(M, bm)

    xp = x
    if (Mp, Kp) != (M, K):
        xp = jnp.pad(x, ((0, Mp - M), (0, Kp - K)))
    xp = xp.astype(jnp.bfloat16)

    wp = w
    if (Kp, Np) != (K, N):
        wp = jnp.pad(w, ((0, Kp - K), (0, Np - N)))
    wp = wp.astype(jnp.bfloat16)

    if scale is None:
        s2 = jnp.ones((1, Np), jnp.float32)
        b2 = jnp.zeros((1, Np), jnp.float32)
    else:
        s2 = jnp.pad(scale.astype(jnp.float32).reshape(1, N), ((0, 0), (0, Np - N)))
        b2 = jnp.pad(shift.astype(jnp.float32).reshape(1, N), ((0, 0), (0, Np - N)))

    grid = (Mp // bm, Np // bn, Kp // bk)
    kern = functools.partial(_matmul_bn_kernel, relu=relu)
    out = pl.pallas_call(
        kern,
        out_shape=jax.ShapeDtypeStruct((Mp, Np), jnp.float32),
        grid_spec=pltpu.PrefetchScalarGridSpec(
            num_scalar_prefetch=0,
            grid=grid,
            in_specs=[
                pl.BlockSpec((bm, bk), lambda i, j, k: (i, k)),
                pl.BlockSpec((bk, bn), lambda i, j, k: (k, j)),
                pl.BlockSpec((1, bn), lambda i, j, k: (0, j)),
                pl.BlockSpec((1, bn), lambda i, j, k: (0, j)),
            ],
            out_specs=pl.BlockSpec((bm, bn), lambda i, j, k: (i, j)),
            scratch_shapes=[pltpu.VMEM((bm, bn), jnp.float32)],
        ),
        compiler_params=pltpu.CompilerParams(
            dimension_semantics=("parallel", "parallel", "arbitrary"),
            vmem_limit_bytes=32 * 1024 * 1024,
        ),
    )(xp, wp, s2, b2)

    if (Mp, Np) != (M, N):
        out = out[:M, :N]
    return out


def pallas_gap_conv(x, p):
    """Fused AdaptiveAvgPool2d(1) -> 1x1 conv -> BN -> ReLU.  x: (N,H,W,C)."""
    N, H, W, C = x.shape
    w = p["w"]                      # (C, Cout)
    Cout = w.shape[1]
    Np = _round_up(Cout, 128)
    wp = jnp.pad(w, ((0, 0), (0, Np - Cout))).astype(jnp.bfloat16)
    s = jnp.pad(p["scale"].astype(jnp.float32).reshape(1, Cout), ((0, 0), (0, Np - Cout)))
    b = jnp.pad(p["shift"].astype(jnp.float32).reshape(1, Cout), ((0, 0), (0, Np - Cout)))
    xf = x.reshape(N, H * W, C).astype(jnp.float32)

    out = pl.pallas_call(
        _gap_conv_kernel,
        out_shape=jax.ShapeDtypeStruct((N, 1, Np), jnp.float32),
        grid=(N,),
        in_specs=[
            pl.BlockSpec((1, H * W, C), lambda i: (i, 0, 0)),
            pl.BlockSpec((C, Np), lambda i: (0, 0)),
            pl.BlockSpec((1, Np), lambda i: (0, 0)),
            pl.BlockSpec((1, Np), lambda i: (0, 0)),
        ],
        out_specs=pl.BlockSpec((1, 1, Np), lambda i: (i, 0, 0)),
        compiler_params=pltpu.CompilerParams(dimension_semantics=("parallel",)),
    )(xf, wp, s, b)
    return out[:, :, :Cout].reshape(N, 1, 1, Cout)


# ----------------------------------------------------------------------------
# Glue: im2col, bilinear-interp matrices, parameter construction
# ----------------------------------------------------------------------------
def im2col(x, kh, kw, stride, dilation, padding):
    """x: (N, H, W, C) -> (N, Ho, Wo, kh*kw*C), patch order (ki, kj, c)."""
    N, H, W, C = x.shape
    xp = jnp.pad(x, ((0, 0), (padding, padding), (padding, padding), (0, 0)))
    Ho = (H + 2 * padding - dilation * (kh - 1) - 1) // stride + 1
    Wo = (W + 2 * padding - dilation * (kw - 1) - 1) // stride + 1
    cols = []
    for i in range(kh):
        for j in range(kw):
            hs = i * dilation
            ws = j * dilation
            patch = xp[:, hs:hs + stride * (Ho - 1) + 1:stride,
                       ws:ws + stride * (Wo - 1) + 1:stride, :]
            cols.append(patch)
    return jnp.concatenate(cols, axis=-1)


def interp_matrix(out_size, in_size):
    """Bilinear (align_corners=True) 1-D interpolation matrix (out, in)."""
    A = np.zeros((out_size, in_size), np.float32)
    if in_size == 1:
        A[:, 0] = 1.0
        return jnp.asarray(A)
    if out_size == 1:
        A[0, 0] = 1.0
        return jnp.asarray(A)
    for i in range(out_size):
        src = i * (in_size - 1) / (out_size - 1)
        i0 = int(np.floor(src))
        i1 = min(i0 + 1, in_size - 1)
        w1 = src - i0
        A[i, i0] += 1.0 - w1
        A[i, i1] += w1
    return jnp.asarray(A)


def upsample_bilinear(x, Hout, Wout):
    """F.interpolate(mode='bilinear', align_corners=True) via two Pallas matmuls."""
    N, Hin, Win, C = x.shape
    if Hin == Hout and Win == Wout:
        return x
    if Hin == 1 and Win == 1:     # align_corners from a 1x1 source == broadcast
        return jnp.broadcast_to(x, (N, Hout, Wout, C))
    A = interp_matrix(Hout, Hin)
    B = interp_matrix(Wout, Win)
    # interpolate along H
    xt = jnp.transpose(x, (1, 0, 2, 3)).reshape(Hin, N * Win * C)
    y = pallas_matmul(A, xt).reshape(Hout, N, Win, C)
    # interpolate along W
    yt = jnp.transpose(y, (2, 1, 0, 3)).reshape(Win, N * Hout * C)
    z = pallas_matmul(B, yt).reshape(Wout, N, Hout, C)
    return jnp.transpose(z, (1, 2, 0, 3))


def make_conv(key, cin, cout, k, with_bn=True, bias=False):
    """Conv2d(cin, cout, k) (+ folded eval-mode BatchNorm2d).  PyTorch weight
    shape (cout, cin, k, k) is generated and re-laid-out to match im2col."""
    ks = jax.random.split(key, 6)
    w = jax.random.normal(ks[0], (cout, cin, k, k), jnp.float32) / np.sqrt(cin * k * k)
    w2 = jnp.transpose(w, (2, 3, 1, 0)).reshape(k * k * cin, cout)
    if with_bn:
        gamma = 1.0 + 0.1 * jax.random.normal(ks[1], (cout,), jnp.float32)
        beta = 0.1 * jax.random.normal(ks[2], (cout,), jnp.float32)
        rmean = 0.1 * jax.random.normal(ks[3], (cout,), jnp.float32)
        rvar = 1.0 + 0.1 * jnp.abs(jax.random.normal(ks[4], (cout,), jnp.float32))
        scale = gamma / jnp.sqrt(rvar + 1e-5)
        shift = beta - rmean * scale
    else:
        scale = jnp.ones((cout,), jnp.float32)
        if bias:
            shift = 0.02 * jax.random.normal(ks[5], (cout,), jnp.float32)
        else:
            shift = jnp.zeros((cout,), jnp.float32)
    return {"w": w2, "scale": scale, "shift": shift, "k": k}


def apply_conv(x, p, stride=1, dilation=1, padding=0, relu=True):
    k = p["k"]
    if k == 1 and stride == 1 and padding == 0:
        cols = x
    else:
        cols = im2col(x, k, k, stride, dilation, padding)
    N, Ho, Wo, Kc = cols.shape
    y = pallas_matmul(cols.reshape(N * Ho * Wo, Kc), p["w"], p["scale"], p["shift"], relu)
    return y.reshape(N, Ho, Wo, -1)


# ----------------------------------------------------------------------------
# DeepLab model (backbone='resnet' [small synthetic], output_stride=16,
# num_classes=21, up_sampling='bilinear')
# ----------------------------------------------------------------------------
def build_params(key, num_classes=21):
    keys = jax.random.split(key, 16)
    C1, C_LOW, C3, C_HIGH = 8, 16, 32, 64     # backbone channels (scaled down)
    C_ASPP, C_DEC_LOW, C_DEC = 32, 16, 32     # ASPP / decoder channels (scaled down)
    p = {}
    # backbone (returns x @ stride 16, low_level_feat @ stride 4)
    p["b1"] = make_conv(keys[0], 3, C1, 3)
    p["b2"] = make_conv(keys[1], C1, C_LOW, 3)
    p["b3"] = make_conv(keys[2], C_LOW, C3, 3)
    p["b4"] = make_conv(keys[3], C3, C_HIGH, 3)
    # ASPP (output_stride=16 -> dilations 1, 6, 12, 18)
    p["aspp1"] = make_conv(keys[4], C_HIGH, C_ASPP, 1)
    p["aspp2"] = make_conv(keys[5], C_HIGH, C_ASPP, 3)
    p["aspp3"] = make_conv(keys[6], C_HIGH, C_ASPP, 3)
    p["aspp4"] = make_conv(keys[7], C_HIGH, C_ASPP, 3)
    p["aspp_pool"] = make_conv(keys[8], C_HIGH, C_ASPP, 1)
    p["aspp_proj"] = make_conv(keys[9], 5 * C_ASPP, C_ASPP, 1)
    # decoder
    p["dec_low"] = make_conv(keys[10], C_LOW, C_DEC_LOW, 1)
    p["dec1"] = make_conv(keys[11], C_ASPP + C_DEC_LOW, C_DEC, 3)
    p["dec2"] = make_conv(keys[12], C_DEC, C_DEC, 3)
    p["cls"] = make_conv(keys[13], C_DEC, num_classes, 1, with_bn=False, bias=True)
    return p


def deeplab_forward(x_nchw, params):
    # layout: input NCHW -> internal NHWC -> output NCHW
    x = jnp.transpose(x_nchw, (0, 2, 3, 1)).astype(jnp.float32)
    N, H, W, _ = x.shape

    # ---- backbone ----
    f = apply_conv(x, params["b1"], stride=2, padding=1)               # stride 2
    low_level_feat = apply_conv(f, params["b2"], stride=2, padding=1)  # stride 4
    f = apply_conv(low_level_feat, params["b3"], stride=2, padding=1)  # stride 8
    feat = apply_conv(f, params["b4"], stride=2, padding=1)            # stride 16

    # ---- ASPP ----
    a1 = apply_conv(feat, params["aspp1"])
    a2 = apply_conv(feat, params["aspp2"], dilation=6, padding=6)
    a3 = apply_conv(feat, params["aspp3"], dilation=12, padding=12)
    a4 = apply_conv(feat, params["aspp4"], dilation=18, padding=18)
    # image pooling branch: GAP + 1x1 conv + BN + ReLU fused into one kernel;
    # the bilinear "upsample" from a 1x1 source is an exact broadcast.
    gp = pallas_gap_conv(feat, params["aspp_pool"])
    gp = jnp.broadcast_to(gp, (N, feat.shape[1], feat.shape[2], gp.shape[-1]))
    y = jnp.concatenate([a1, a2, a3, a4, gp], axis=-1)
    y = apply_conv(y, params["aspp_proj"])            # 1x1 + BN + ReLU
    # TODO(synk): Dropout(0.5) after ASPP projection omitted (inference mode).

    # ---- decoder ----
    ll = apply_conv(low_level_feat, params["dec_low"])
    y = upsample_bilinear(y, low_level_feat.shape[1], low_level_feat.shape[2])
    y = jnp.concatenate([y, ll], axis=-1)
    y = apply_conv(y, params["dec1"], padding=1)
    # TODO(synk): Dropout(0.5) omitted (inference mode).
    y = apply_conv(y, params["dec2"], padding=1)
    # TODO(synk): Dropout(0.1) omitted (inference mode).
    y = apply_conv(y, params["cls"], relu=False)      # 1x1 classifier (bias, no BN)

    # ---- final upsample to input size (bilinear, align_corners=True) ----
    y = upsample_bilinear(y, H, W)
    return jnp.transpose(y, (0, 3, 1, 2))             # back to NCHW


if __name__ == "__main__":
    key = jax.random.PRNGKey(0)
    k_param, k_input = jax.random.split(key)
    params = build_params(k_param, num_classes=21)

    # small input consistent with the module: NCHW, RGB image
    x = jax.random.normal(k_input, (2, 3, 32, 32), jnp.float32)

    out = deeplab_forward(x, params)
    out = jax.block_until_ready(out)

    assert out.shape == (2, 21, 32, 32), out.shape
    assert out.dtype == jnp.float32
    assert bool(jnp.all(jnp.isfinite(out)))
    print("KERNEL_OK")
</pallas_src>

<mosaic_0001>
module attributes {stable_mosaic.version = 11 : i64} {
  func.func @_matmul_bn_kernel(%arg0: i32, %arg1: i32, %arg2: i32, %arg3: memref<512x27xbf16, #tpu.memory_space<vmem>>, %arg4: memref<27x128xbf16, #tpu.memory_space<vmem>>, %arg5: memref<1x128xf32, #tpu.memory_space<vmem>>, %arg6: memref<1x128xf32, #tpu.memory_space<vmem>>, %arg7: memref<512x128xf32, #tpu.memory_space<vmem>>, %arg8: memref<512x128xf32, #tpu.memory_space<vmem>>) attributes {dimension_semantics = [#tpu.dimension_semantics<parallel>, #tpu.dimension_semantics<parallel>, #tpu.dimension_semantics<arbitrary>], iteration_bounds = array<i64: 1, 1, 1>, scalar_prefetch = 0 : i64, scratch_operands = 1 : i64, tpu.core_type = #tpu.core_type<tc>, window_params = [{transform_indices = @transform_0, window_bounds = array<i64: 512, 27>}, {transform_indices = @transform_1, window_bounds = array<i64: 27, 128>}, {transform_indices = @transform_2, window_bounds = array<i64: 1, 128>}, {transform_indices = @transform_3, window_bounds = array<i64: 1, 128>}, {transform_indices = @transform_4, window_bounds = array<i64: 512, 128>}]} {
    %c0_i32 = arith.constant 0 : i32
    %0 = arith.cmpi eq, %arg2, %c0_i32 : i32
    %1 = arith.extui %0 : i1 to i32
    %c0_i32_0 = arith.constant 0 : i32
    %2 = arith.cmpi ne, %1, %c0_i32_0 : i32
    scf.if %2 {
      %cst_10 = arith.constant 0.000000e+00 : f32
      %12 = vector.broadcast %cst_10 : f32 to vector<512x128xf32>
      %c0_11 = arith.constant 0 : index
      %c0_12 = arith.constant 0 : index
      %13 = vector.load %arg8[%c0_11, %c0_12] : memref<512x128xf32, #tpu.memory_space<vmem>>, vector<512x128xf32>
      tpu.vector_store %arg8[%c0_11, %c0_12], %12 {strides = array<i32>} : memref<512x128xf32, #tpu.memory_space<vmem>>, vector<512x128xf32>,
    } else {
    }
    %c0 = arith.constant 0 : index
    %c0_1 = arith.constant 0 : index
    %3 = vector.load %arg8[%c0, %c0_1] : memref<512x128xf32, #tpu.memory_space<vmem>>, vector<512x128xf32>
    %c0_2 = arith.constant 0 : index
    %c0_3 = arith.constant 0 : index
    %4 = vector.load %arg3[%c0_2, %c0_3] : memref<512x27xbf16, #tpu.memory_space<vmem>>, vector<512x27xbf16>
    %c0_4 = arith.constant 0 : index
    %c0_5 = arith.constant 0 : index
    %5 = vector.load %arg4[%c0_4, %c0_5] : memref<27x128xbf16, #tpu.memory_space<vmem>>, vector<27x128xbf16>
    %cst = arith.constant dense<0.000000e+00> : vector<512x128xf32>
    %6 = tpu.matmul %4, %5, %cst {dimension_numbers = #tpu.dot_dimension_numbers<[1], [0], [0], [1], [0, 0, 1, 1], [], []>} : vector<512x27xbf16>, vector<27x128xbf16>, vector<512x128xf32> -> vector<512x128xf32>
    %7 = arith.addf %3, %6 : vector<512x128xf32>
    %c0_6 = arith.constant 0 : index
    %c0_7 = arith.constant 0 : index
    %8 = vector.load %arg8[%c0_6, %c0_7] : memref<512x128xf32, #tpu.memory_space<vmem>>, vector<512x128xf32>
    tpu.vector_store %arg8[%c0_6, %c0_7], %7 {strides = array<i32>} : memref<512x128xf32, #tpu.memory_space<vmem>>, vector<512x128xf32>,
    %c0_i32_8 = arith.constant 0 : i32
    %9 = arith.cmpi eq, %arg2, %c0_i32_8 : i32
    %10 = arith.extui %9 : i1 to i32
    %c0_i32_9 = arith.constant 0 : i32
    %11 = arith.cmpi ne, %10, %c0_i32_9 : i32
    scf.if %11 {
      %c0_10 = arith.constant 0 : index
      %c0_11 = arith.constant 0 : index
      %12 = vector.load %arg8[%c0_10, %c0_11] : memref<512x128xf32, #tpu.memory_space<vmem>>, vector<512x128xf32>
      %c0_12 = arith.constant 0 : index
      %c0_13 = arith.constant 0 : index
      %13 = vector.load %arg5[%c0_12, %c0_13] : memref<1x128xf32, #tpu.memory_space<vmem>>, vector<1x128xf32>
      %14 = vector.broadcast %13 : vector<1x128xf32> to vector<512x128xf32>
      %15 = arith.mulf %12, %14 : vector<512x128xf32>
      %c0_14 = arith.constant 0 : index
      %c0_15 = arith.constant 0 : index
      %16 = vector.load %arg6[%c0_14, %c0_15] : memref<1x128xf32, #tpu.memory_space<vmem>>, vector<1x128xf32>
      %17 = vector.broadcast %16 : vector<1x128xf32> to vector<512x128xf32>
      %18 = arith.addf %15, %17 : vector<512x128xf32>
      %cst_16 = arith.constant 0.000000e+00 : f32
      %19 = vector.broadcast %cst_16 : f32 to vector<512x128xf32>
      %20 = arith.maximumf %18, %19 : vector<512x128xf32>
      %c0_17 = arith.constant 0 : index
      %c0_18 = arith.constant 0 : index
      %21 = vector.load %arg7[%c0_17, %c0_18] : memref<512x128xf32, #tpu.memory_space<vmem>>, vector<512x128xf32>
      tpu.vector_store %arg7[%c0_17, %c0_18], %20 {strides = array<i32>} : memref<512x128xf32, #tpu.memory_space<vmem>>, vector<512x128xf32>,
    } else {
    }
    return
  }
  func.func @transform_0(%arg0: i32, %arg1: i32, %arg2: i32) -> (i32, i32) {
    %c0_i32 = arith.constant 0 : i32
    return %arg0, %arg2 : i32, i32
  }
  func.func @transform_1(%arg0: i32, %arg1: i32, %arg2: i32) -> (i32, i32) {
    %c0_i32 = arith.constant 0 : i32
    return %arg2, %arg1 : i32, i32
  }
  func.func @transform_2(%arg0: i32, %arg1: i32, %arg2: i32) -> (i32, i32) {
    %c0_i32 = arith.constant 0 : i32
    %c0_i32_0 = arith.constant 0 : i32
    return %c0_i32, %arg1 : i32, i32
  }
  func.func @transform_3(%arg0: i32, %arg1: i32, %arg2: i32) -> (i32, i32) {
    %c0_i32 = arith.constant 0 : i32
    %c0_i32_0 = arith.constant 0 : i32
    return %c0_i32, %arg1 : i32, i32
  }
  func.func @transform_4(%arg0: i32, %arg1: i32, %arg2: i32) -> (i32, i32) {
    %c0_i32 = arith.constant 0 : i32
    return %arg0, %arg1 : i32, i32
  }
}

</mosaic_0001>

<llo_original>
// kernel: tpu_custom_call.1
$region0: #{tpu_custom_call.1}
  #allocation0 [shape = 'u32[]', space=smem, size = 0x4, offset = 0x4, fixed_abs, tag = 'smem constant byte address 0x4 - core index']
  #allocation1 [shape = 'u32[72,128]{1,0:T(1,128)}', space=vmem, size = 0x9000, scoped, tag = 'internal scratch']
  #allocation2 [shape = 'f32[512,128]{1,0:T(8,128)}', space=vmem, size = 0x40000, scoped, tag = 'scratch operand']
  %s0 = inlined_call_operand.vmem [shape: bf16[512,27], index: 0, kind: input, shape index: {}]
  %s1 = inlined_call_operand.vmem [shape: bf16[27,128], index: 1, kind: input, shape index: {}]
  %s2 = inlined_call_operand.vmem [shape: f32[1,128], index: 2, kind: input, shape index: {}]
  %s3 = inlined_call_operand.vmem [shape: f32[1,128], index: 3, kind: input, shape index: {}]
  %s4 = inlined_call_operand.hbm [shape: f32[512,128], index: 4, kind: output, shape index: {}]
  %s5 = sld [smem:[#allocation0]]
  $region34: #{tpu_custom_call.1} parent=0
    _
  %s7 = ssub.s32 1, %s5
  %s8 = scalar_select 0, %s7, %s5
  $region1: #{tpu_custom_call.1} parent=0
    #allocation3 [shape = 'u8[262144]{0}', space=vmem, size = 0x40000, scoped, tag = 'output window, operand 0, single buffered']
    #allocation4 [shape = 's32[1]{0}', space=sflag, size = 0x4, scoped, tag = 'scoped memory for tpu_custom_call.1']
    %9 = vsyncpa [#allocation4], 0
    // Predicated region
    $region2: #{tpu_custom_call.1} parent=1 // pred_check
      _
    $region3: #{tpu_custom_call.1} parent=1 // pred_check_branch
      %11 = sbr.rel (0) target = $region5
    $region4: #{tpu_custom_call.1} parent=1 // pred_region
      _
    $region5: #{tpu_custom_call.1} parent=1 // pred_fallthru
      _
    // Predicated region
    $region6: #{tpu_custom_call.1} parent=1 // pred_check
      _
    $region7: #{tpu_custom_call.1} parent=1 // pred_check_branch
      %13 = sbr.rel (0) target = $region9
    $region8: #{tpu_custom_call.1} parent=1 // pred_region
      _
    $region9: #{tpu_custom_call.1} parent=1 // pred_fallthru
      _
    // Predicated region
    $region10: #{tpu_custom_call.1} parent=1 // pred_check
      _
    $region11: #{tpu_custom_call.1} parent=1 // pred_check_branch
      %15 = sbr.rel (0) target = $region13
    $region12: #{tpu_custom_call.1} parent=1 // pred_region
      _
    $region13: #{tpu_custom_call.1} parent=1 // pred_fallthru
      _
    // Predicated region
    $region14: #{tpu_custom_call.1} parent=1 // pred_check
      _
    $region15: #{tpu_custom_call.1} parent=1 // pred_check_branch
      %17 = sbr.rel (0) target = $region17
    $region16: #{tpu_custom_call.1} parent=1 // pred_region
      _
    $region17: #{tpu_custom_call.1} parent=1 // pred_fallthru
      _
    %p19 = scmp.eq.s32.totalorder 0, 0
    // Predicated region
    $region18: #{tpu_custom_call.1} parent=1 // pred_check
      %p20 = pneg %p19
    $region19: #{tpu_custom_call.1} parent=1 // pred_check_branch
      %22 = sbr.rel (%p20) target = $region21
    $region20: #{tpu_custom_call.1} parent=1 // pred_region
      %23 = vst [vmem:[#allocation2] sm:$0xff] 0.0
      %24 = vst [vmem:[#allocation2 + $0x8] sm:$0xff] 0.0
      %25 = vst [vmem:[#allocation2 + $0x10] sm:$0xff] 0.0
      %26 = vst [vmem:[#allocation2 + $0x18] sm:$0xff] 0.0
      %27 = vst [vmem:[#allocation2 + $0x20] sm:$0xff] 0.0
      %28 = vst [vmem:[#allocation2 + $0x28] sm:$0xff] 0.0
      %29 = vst [vmem:[#allocation2 + $0x30] sm:$0xff] 0.0
      %30 = vst [vmem:[#allocation2 + $0x38] sm:$0xff] 0.0
      %31 = vst [vmem:[#allocation2 + $0x40] sm:$0xff] 0.0
      %32 = vst [vmem:[#allocation2 + $0x48] sm:$0xff] 0.0
      %33 = vst [vmem:[#allocation2 + $0x50] sm:$0xff] 0.0
      %34 = vst [vmem:[#allocation2 + $0x58] sm:$0xff] 0.0
      %35 = vst [vmem:[#allocation2 + $0x60] sm:$0xff] 0.0
      %36 = vst [vmem:[#allocation2 + $0x68] sm:$0xff] 0.0
      %37 = vst [vmem:[#allocation2 + $0x70] sm:$0xff] 0.0
      %38 = vst [vmem:[#allocation2 + $0x78] sm:$0xff] 0.0
      %39 = vst [vmem:[#allocation2 + $0x80] sm:$0xff] 0.0
      %40 = vst [vmem:[#allocation2 + $0x88] sm:$0xff] 0.0
      %41 = vst [vmem:[#allocation2 + $0x90] sm:$0xff] 0.0
      %42 = vst [vmem:[#allocation2 + $0x98] sm:$0xff] 0.0
      %43 = vst [vmem:[#allocation2 + $0xa0] sm:$0xff] 0.0
      %44 = vst [vmem:[#allocation2 + $0xa8] sm:$0xff] 0.0
      %45 = vst [vmem:[#allocation2 + $0xb0] sm:$0xff] 0.0
      %46 = vst [vmem:[#allocation2 + $0xb8] sm:$0xff] 0.0
      %47 = vst [vmem:[#allocation2 + $0xc0] sm:$0xff] 0.0
      %48 = vst [vmem:[#allocation2 + $0xc8] sm:$0xff] 0.0
      %49 = vst [vmem:[#allocation2 + $0xd0] sm:$0xff] 0.0
      %50 = vst [vmem:[#allocation2 + $0xd8] sm:$0xff] 0.0
      %51 = vst [vmem:[#allocation2 + $0xe0] sm:$0xff] 0.0
      %52 = vst [vmem:[#allocation2 + $0xe8] sm:$0xff] 0.0
      %53 = vst [vmem:[#allocation2 + $0xf0] sm:$0xff] 0.0
      %54 = vst [vmem:[#allocation2 + $0xf8] sm:$0xff] 0.0
      %55 = vst [vmem:[#allocation2 + $0x100] sm:$0xff] 0.0
      %56 = vst [vmem:[#allocation2 + $0x108] sm:$0xff] 0.0
      %57 = vst [vmem:[#allocation2 + $0x110] sm:$0xff] 0.0
      %58 = vst [vmem:[#allocation2 + $0x118] sm:$0xff] 0.0
      %59 = vst [vmem:[#allocation2 + $0x120] sm:$0xff] 0.0
      %60 = vst [vmem:[#allocation2 + $0x128] sm:$0xff] 0.0
      %61 = vst [vmem:[#allocation2 + $0x130] sm:$0xff] 0.0
      %62 = vst [vmem:[#allocation2 + $0x138] sm:$0xff] 0.0
      %63 = vst [vmem:[#allocation2 + $0x140] sm:$0xff] 0.0
      %64 = vst [vmem:[#allocation2 + $0x148] sm:$0xff] 0.0
      %65 = vst [vmem:[#allocation2 + $0x150] sm:$0xff] 0.0
      %66 = vst [vmem:[#allocation2 + $0x158] sm:$0xff] 0.0
      %67 = vst [vmem:[#allocation2 + $0x160] sm:$0xff] 0.0
      %68 = vst [vmem:[#allocation2 + $0x168] sm:$0xff] 0.0
      %69 = vst [vmem:[#allocation2 + $0x170] sm:$0xff] 0.0
      %70 = vst [vmem:[#allocation2 + $0x178] sm:$0xff] 0.0
      %71 = vst [vmem:[#allocation2 + $0x180] sm:$0xff] 0.0
      %72 = vst [vmem:[#allocation2 + $0x188] sm:$0xff] 0.0
      %73 = vst [vmem:[#allocation2 + $0x190] sm:$0xff] 0.0
      %74 = vst [vmem:[#allocation2 + $0x198] sm:$0xff] 0.0
      %75 = vst [vmem:[#allocation2 + $0x1a0] sm:$0xff] 0.0
      %76 = vst [vmem:[#allocation2 + $0x1a8] sm:$0xff] 0.0
      %77 = vst [vmem:[#allocation2 + $0x1b0] sm:$0xff] 0.0
      %78 = vst [vmem:[#allocation2 + $0x1b8] sm:$0xff] 0.0
      %79 = vst [vmem:[#allocation2 + $0x1c0] sm:$0xff] 0.0
      %80 = vst [vmem:[#allocation2 + $0x1c8] sm:$0xff] 0.0
      %81 = vst [vmem:[#allocation2 + $0x1d0] sm:$0xff] 0.0
      %82 = vst [vmem:[#allocation2 + $0x1d8] sm:$0xff] 0.0
      %83 = vst [vmem:[#allocation2 + $0x1e0] sm:$0xff] 0.0
      %84 = vst [vmem:[#allocation2 + $0x1e8] sm:$0xff] 0.0
      %85 = vst [vmem:[#allocation2 + $0x1f0] sm:$0xff] 0.0
      %86 = vst [vmem:[#allocation2 + $0x1f8] sm:$0xff] 0.0
    $region21: #{tpu_custom_call.1} parent=1 // pred_fallthru
      _
    %v87 = vld [vmem:[#allocation2] sm:$0xff]
    %v88 = vld [vmem:[#allocation2 + $0x8] sm:$0xff]
    %v89 = vld [vmem:[#allocation2 + $0x10] sm:$0xff]
    %v90 = vld [vmem:[#allocation2 + $0x18] sm:$0xff]
    %v91 = vld [vmem:[#allocation2 + $0x20] sm:$0xff]
    %v92 = vld [vmem:[#allocation2 + $0x28] sm:$0xff]
    %v93 = vld [vmem:[#allocation2 + $0x30] sm:$0xff]
    %v94 = vld [vmem:[#allocation2 + $0x38] sm:$0xff]
    %v95 = vld [vmem:[#allocation2 + $0x40] sm:$0xff]
    %v96 = vld [vmem:[#allocation2 + $0x48] sm:$0xff]
    %v97 = vld [vmem:[#allocation2 + $0x50] sm:$0xff]
    %v98 = vld [vmem:[#allocation2 + $0x58] sm:$0xff]
    %v99 = vld [vmem:[#allocation2 + $0x60] sm:$0xff]
    %v100 = vld [vmem:[#allocation2 + $0x68] sm:$0xff]
    %v101 = vld [vmem:[#allocation2 + $0x70] sm:$0xff]
    %v102 = vld [vmem:[#allocation2 + $0x78] sm:$0xff]
    %v103 = vld [vmem:[#allocation2 + $0x80] sm:$0xff]
    %v104 = vld [vmem:[#allocation2 + $0x88] sm:$0xff]
    %v105 = vld [vmem:[#allocation2 + $0x90] sm:$0xff]
    %v106 = vld [vmem:[#allocation2 + $0x98] sm:$0xff]
    %v107 = vld [vmem:[#allocation2 + $0xa0] sm:$0xff]
    %v108 = vld [vmem:[#allocation2 + $0xa8] sm:$0xff]
    %v109 = vld [vmem:[#allocation2 + $0xb0] sm:$0xff]
    %v110 = vld [vmem:[#allocation2 + $0xb8] sm:$0xff]
    %v111 = vld [vmem:[#allocation2 + $0xc0] sm:$0xff]
    %v112 = vld [vmem:[#allocation2 + $0xc8] sm:$0xff]
    %v113 = vld [vmem:[#allocation2 + $0xd0] sm:$0xff]
    %v114 = vld [vmem:[#allocation2 + $0xd8] sm:$0xff]
    %v115 = vld [vmem:[#allocation2 + $0xe0] sm:$0xff]
    %v116 = vld [vmem:[#allocation2 + $0xe8] sm:$0xff]
    %v117 = vld [vmem:[#allocation2 + $0xf0] sm:$0xff]
    %v118 = vld [vmem:[#allocation2 + $0xf8] sm:$0xff]
    %v119 = vld [vmem:[#allocation2 + $0x100] sm:$0xff]
    %v120 = vld [vmem:[#allocation2 + $0x108] sm:$0xff]
    %v121 = vld [vmem:[#allocation2 + $0x110] sm:$0xff]
    %v122 = vld [vmem:[#allocation2 + $0x118] sm:$0xff]
    %v123 = vld [vmem:[#allocation2 + $0x120] sm:$0xff]
    %v124 = vld [vmem:[#allocation2 + $0x128] sm:$0xff]
    %v125 = vld [vmem:[#allocation2 + $0x130] sm:$0xff]
    %v126 = vld [vmem:[#allocation2 + $0x138] sm:$0xff]
    %v127 = vld [vmem:[#allocation2 + $0x140] sm:$0xff]
    %v128 = vld [vmem:[#allocation2 + $0x148] sm:$0xff]
    %v129 = vld [vmem:[#allocation2 + $0x150] sm:$0xff]
    %v130 = vld [vmem:[#allocation2 + $0x158] sm:$0xff]
    %v131 = vld [vmem:[#allocation2 + $0x160] sm:$0xff]
    %v132 = vld [vmem:[#allocation2 + $0x168] sm:$0xff]
    %v133 = vld [vmem:[#allocation2 + $0x170] sm:$0xff]
    %v134 = vld [vmem:[#allocation2 + $0x178] sm:$0xff]
    %v135 = vld [vmem:[#allocation2 + $0x180] sm:$0xff]
    %v136 = vld [vmem:[#allocation2 + $0x188] sm:$0xff]
    %v137 = vld [vmem:[#allocation2 + $0x190] sm:$0xff]
    %v138 = vld [vmem:[#allocation2 + $0x198] sm:$0xff]
    %v139 = vld [vmem:[#allocation2 + $0x1a0] sm:$0xff]
    %v140 = vld [vmem:[#allocation2 + $0x1a8] sm:$0xff]
    %v141 = vld [vmem:[#allocation2 + $0x1b0] sm:$0xff]
    %v142 = vld [vmem:[#allocation2 + $0x1b8] sm:$0xff]
    %v143 = vld [vmem:[#allocation2 + $0x1c0] sm:$0xff]
    %v144 = vld [vmem:[#allocation2 + $0x1c8] sm:$0xff]
    %v145 = vld [vmem:[#allocation2 + $0x1d0] sm:$0xff]
    %v146 = vld [vmem:[#allocation2 + $0x1d8] sm:$0xff]
    %v147 = vld [vmem:[#allocation2 + $0x1e0] sm:$0xff]
    %v148 = vld [vmem:[#allocation2 + $0x1e8] sm:$0xff]
    %v149 = vld [vmem:[#allocation2 + $0x1f0] sm:$0xff]
    %v150 = vld [vmem:[#allocation2 + $0x1f8] sm:$0xff]
    %v151 = vld [vmem:[%s0] sm:$0xf]
    %v152 = vld [vmem:[%s0 + $0x4] sm:$0xf]
    %v153 = vld [vmem:[%s0 + $0x8] sm:$0xf]
    %v154 = vld [vmem:[%s0 + $0xc] sm:$0xf]
    %v155 = vld [vmem:[%s0 + $0x10] sm:$0xf]
    %v156 = vld [vmem:[%s0 + $0x14] sm:$0xf]
    %v157 = vld [vmem:[%s0 + $0x18] sm:$0xf]
    %v158 = vld [vmem:[%s0 + $0x1c] sm:$0xf]
    %v159 = vld [vmem:[%s0 + $0x20] sm:$0xf]
    %v160 = vld [vmem:[%s0 + $0x24] sm:$0xf]
    %v161 = vld [vmem:[%s0 + $0x28] sm:$0xf]
    %v162 = vld [vmem:[%s0 + $0x2c] sm:$0xf]
    %v163 = vld [vmem:[%s0 + $0x30] sm:$0xf]
    %v164 = vld [vmem:[%s0 + $0x34] sm:$0xf]
    %v165 = vld [vmem:[%s0 + $0x38] sm:$0xf]
    %v166 = vld [vmem:[%s0 + $0x3c] sm:$0xf]
    %v167 = vld [vmem:[%s0 + $0x40] sm:$0xf]
    %v168 = vld [vmem:[%s0 + $0x44] sm:$0xf]
    %v169 = vld [vmem:[%s0 + $0x48] sm:$0xf]
    %v170 = vld [vmem:[%s0 + $0x4c] sm:$0xf]
    %v171 = vld [vmem:[%s0 + $0x50] sm:$0xf]
    %v172 = vld [vmem:[%s0 + $0x54] sm:$0xf]
    %v173 = vld [vmem:[%s0 + $0x58] sm:$0xf]
    %v174 = vld [vmem:[%s0 + $0x5c] sm:$0xf]
    %v175 = vld [vmem:[%s0 + $0x60] sm:$0xf]
    %v176 = vld [vmem:[%s0 + $0x64] sm:$0xf]
    %v177 = vld [vmem:[%s0 + $0x68] sm:$0xf]
    %v178 = vld [vmem:[%s0 + $0x6c] sm:$0xf]
    %v179 = vld [vmem:[%s0 + $0x70] sm:$0xf]
    %v180 = vld [vmem:[%s0 + $0x74] sm:$0xf]
    %v181 = vld [vmem:[%s0 + $0x78] sm:$0xf]
    %v182 = vld [vmem:[%s0 + $0x7c] sm:$0xf]
    %v183 = vld [vmem:[%s0 + $0x80] sm:$0xf]
    %v184 = vld [vmem:[%s0 + $0x84] sm:$0xf]
    %v185 = vld [vmem:[%s0 + $0x88] sm:$0xf]
    %v186 = vld [vmem:[%s0 + $0x8c] sm:$0xf]
    %v187 = vld [vmem:[%s0 + $0x90] sm:$0xf]
    %v188 = vld [vmem:[%s0 + $0x94] sm:$0xf]
    %v189 = vld [vmem:[%s0 + $0x98] sm:$0xf]
    %v190 = vld [vmem:[%s0 + $0x9c] sm:$0xf]
    %v191 = vld [vmem:[%s0 + $0xa0] sm:$0xf]
    %v192 = vld [vmem:[%s0 + $0xa4] sm:$0xf]
    %v193 = vld [vmem:[%s0 + $0xa8] sm:$0xf]
    %v194 = vld [vmem:[%s0 + $0xac] sm:$0xf]
    %v195 = vld [vmem:[%s0 + $0xb0] sm:$0xf]
    %v196 = vld [vmem:[%s0 + $0xb4] sm:$0xf]
    %v197 = vld [vmem:[%s0 + $0xb8] sm:$0xf]
    %v198 = vld [vmem:[%s0 + $0xbc] sm:$0xf]
    %v199 = vld [vmem:[%s0 + $0xc0] sm:$0xf]
    %v200 = vld [vmem:[%s0 + $0xc4] sm:$0xf]
    %v201 = vld [vmem:[%s0 + $0xc8] sm:$0xf]
    %v202 = vld [vmem:[%s0 + $0xcc] sm:$0xf]
    %v203 = vld [vmem:[%s0 + $0xd0] sm:$0xf]
    %v204 = vld [vmem:[%s0 + $0xd4] sm:$0xf]
    %v205 = vld [vmem:[%s0 + $0xd8] sm:$0xf]
    %v206 = vld [vmem:[%s0 + $0xdc] sm:$0xf]
    %v207 = vld [vmem:[%s0 + $0xe0] sm:$0xf]
    %v208 = vld [vmem:[%s0 + $0xe4] sm:$0xf]
    %v209 = vld [vmem:[%s0 + $0xe8] sm:$0xf]
    %v210 = vld [vmem:[%s0 + $0xec] sm:$0xf]
    %v211 = vld [vmem:[%s0 + $0xf0] sm:$0xf]
    %v212 = vld [vmem:[%s0 + $0xf4] sm:$0xf]
    %v213 = vld [vmem:[%s0 + $0xf8] sm:$0xf]
    %v214 = vld [vmem:[%s0 + $0xfc] sm:$0xf]
    %v215 = vld [vmem:[%s1] sm:$0xf]
    %v216 = vld [vmem:[%s1 + $0x4] sm:$0xf]
    %v217 = vld [vmem:[%s1 + $0x8] sm:$0xf]
    %v218 = vld [vmem:[%s1 + $0xc] sm:$0x3]
    %v283 = vunpack.c.l.b16 %v151
    %v284 = vunpack.c.l.b16 %v152
    %v285 = vunpack.c.l.b16 %v153
    %v286 = vunpack.c.l.b16 %v154
    %v287 = vunpack.c.l.b16 %v155
    %v288 = vunpack.c.l.b16 %v156
    %v289 = vunpack.c.l.b16 %v157
    %v290 = vunpack.c.l.b16 %v158
    %v291 = vunpack.c.l.b16 %v159
    %v292 = vunpack.c.l.b16 %v160
    %v293 = vunpack.c.l.b16 %v161
    %v294 = vunpack.c.l.b16 %v162
    %v295 = vunpack.c.l.b16 %v163
    %v296 = vunpack.c.l.b16 %v164
    %v297 = vunpack.c.l.b16 %v165
    %v298 = vunpack.c.l.b16 %v166
    %v299 = vunpack.c.l.b16 %v167
    %v300 = vunpack.c.l.b16 %v168
    %v301 = vunpack.c.l.b16 %v169
    %v302 = vunpack.c.l.b16 %v170
    %v303 = vunpack.c.l.b16 %v171
    %v304 = vunpack.c.l.b16 %v172
    %v305 = vunpack.c.l.b16 %v173
    %v306 = vunpack.c.l.b16 %v174
    %v307 = vunpack.c.l.b16 %v175
    %v308 = vunpack.c.l.b16 %v176
    %v309 = vunpack.c.l.b16 %v177
    %v310 = vunpack.c.l.b16 %v178
    %v311 = vunpack.c.l.b16 %v179
    %v312 = vunpack.c.l.b16 %v180
    %v313 = vunpack.c.l.b16 %v181
    %v314 = vunpack.c.l.b16 %v182
    %v315 = vunpack.c.l.b16 %v183
    %v316 = vunpack.c.l.b16 %v184
    %v317 = vunpack.c.l.b16 %v185
    %v318 = vunpack.c.l.b16 %v186
    %v319 = vunpack.c.l.b16 %v187
    %v320 = vunpack.c.l.b16 %v188
    %v321 = vunpack.c.l.b16 %v189
    %v322 = vunpack.c.l.b16 %v190
    %v323 = vunpack.c.l.b16 %v191
    %v324 = vunpack.c.l.b16 %v192
    %v325 = vunpack.c.l.b16 %v193
    %v326 = vunpack.c.l.b16 %v194
    %v327 = vunpack.c.l.b16 %v195
    %v328 = vunpack.c.l.b16 %v196
    %v329 = vunpack.c.l.b16 %v197
    %v330 = vunpack.c.l.b16 %v198
    %v331 = vunpack.c.l.b16 %v199
    %v332 = vunpack.c.l.b16 %v200
    %v333 = vunpack.c.l.b16 %v201
    %v334 = vunpack.c.l.b16 %v202
    %v335 = vunpack.c.l.b16 %v203
    %v336 = vunpack.c.l.b16 %v204
    %v337 = vunpack.c.l.b16 %v205
    %v338 = vunpack.c.l.b16 %v206
    %v339 = vunpack.c.l.b16 %v207
    %v340 = vunpack.c.l.b16 %v208
    %v341 = vunpack.c.l.b16 %v209
    %v342 = vunpack.c.l.b16 %v210
    %v343 = vunpack.c.l.b16 %v211
    %v344 = vunpack.c.l.b16 %v212
    %v345 = vunpack.c.l.b16 %v213
    %v346 = vunpack.c.l.b16 %v214
    %v347 = vpack.c.b16 %v284, %v283
    %v348 = vpack.c.b16 %v286, %v285
    %v349 = vpack.c.b16 %v288, %v287
    %v350 = vpack.c.b16 %v290, %v289
    %v351 = vpack.c.b16 %v292, %v291
    %v352 = vpack.c.b16 %v294, %v293
    %v353 = vpack.c.b16 %v296, %v295
    %v354 = vpack.c.b16 %v298, %v297
    %v355 = vpack.c.b16 %v300, %v299
    %v356 = vpack.c.b16 %v302, %v301
    %v357 = vpack.c.b16 %v304, %v303
    %v358 = vpack.c.b16 %v306, %v305
    %v359 = vpack.c.b16 %v308, %v307
    %v360 = vpack.c.b16 %v310, %v309
    %v361 = vpack.c.b16 %v312, %v311
    %v362 = vpack.c.b16 %v314, %v313
    %v363 = vpack.c.b16 %v316, %v315
    %v364 = vpack.c.b16 %v318, %v317
    %v365 = vpack.c.b16 %v320, %v319
    %v366 = vpack.c.b16 %v322, %v321
    %v367 = vpack.c.b16 %v324, %v323
    %v368 = vpack.c.b16 %v326, %v325
    %v369 = vpack.c.b16 %v328, %v327
    %v370 = vpack.c.b16 %v330, %v329
    %v371 = vpack.c.b16 %v332, %v331
    %v372 = vpack.c.b16 %v334, %v333
    %v373 = vpack.c.b16 %v336, %v335
    %v374 = vpack.c.b16 %v338, %v337
    %v375 = vpack.c.b16 %v340, %v339
    %v376 = vpack.c.b16 %v342, %v341
    %v377 = vpack.c.b16 %v344, %v343
    %v378 = vpack.c.b16 %v346, %v345
    %v383 = vunpack.c.l.b16 %v215
    %v384 = vunpack.c.l.b16 %v216
    %v385 = vunpack.c.l.b16 %v217
    %v386 = vunpack.c.l.b16 %v218
    %v387 = vpack.c.b16 %v384, %v383
    %v388 = vpack.c.b16 %v386, %v385
    %vm390 = vcmask 220160
    %v392 = vsel %vm390, %v347, 0
    %v395 = vsel %vm390, %v348, 0
    %v398 = vsel %vm390, %v349, 0
    %v401 = vsel %vm390, %v350, 0
    %v404 = vsel %vm390, %v351, 0
    %v407 = vsel %vm390, %v352, 0
    %v410 = vsel %vm390, %v353, 0
    %v413 = vsel %vm390, %v354, 0
    %v416 = vsel %vm390, %v355, 0
    %v419 = vsel %vm390, %v356, 0
    %v422 = vsel %vm390, %v357, 0
    %v425 = vsel %vm390, %v358, 0
    %v428 = vsel %vm390, %v359, 0
    %v431 = vsel %vm390, %v360, 0
    %v434 = vsel %vm390, %v361, 0
    %v437 = vsel %vm390, %v362, 0
    %v440 = vsel %vm390, %v363, 0
    %v443 = vsel %vm390, %v364, 0
    %v446 = vsel %vm390, %v365, 0
    %v449 = vsel %vm390, %v366, 0
    %v452 = vsel %vm390, %v367, 0
    %v455 = vsel %vm390, %v368, 0
    %v458 = vsel %vm390, %v369, 0
    %v461 = vsel %vm390, %v370, 0
    %v464 = vsel %vm390, %v371, 0
    %v467 = vsel %vm390, %v372, 0
    %v470 = vsel %vm390, %v373, 0
    %v473 = vsel %vm390, %v374, 0
    %v476 = vsel %vm390, %v375, 0
    %v479 = vsel %vm390, %v376, 0
    %v482 = vsel %vm390, %v377, 0
    %v485 = vsel %vm390, %v378, 0
    %vm487 = vcmask 1044480
    %vm488 = vcmask 1045504
    %v489 = vsel %vm487, 4294967295, 65535
    %v490 = vsel %vm488, %v489, 0
    %v492 = vand.u32 %v388, %v490
    %494 = vmatpush.bf16.msra.mxu0 0
    %495 = vmatpush.bf16.msra.mxu0 0
    %496 = vmatpush.bf16.msra.mxu0 0
    %497 = vmatpush.bf16.msra.mxu0 0
    %498 = vmatpush.bf16.msra.mxu0 0
    %499 = vmatpush.bf16.msra.mxu0 0
    %500 = vmatpush.bf16.msra.mxu0 %v492
    %501 = vmatpush.bf16.msra.mxu0 %v387
    %502 = vmatmul.bf16.gmra.mxu0 %v392
    %v503 = vpop.f32.mrf.mxu0
    %v504 = vadd.f32 0.0, %v503
    %v505 = vpop.f32.mrf.mxu0
    %v506 = vadd.f32 0.0, %v505
    %507 = vmatmul.bf16.gmra.mxu0 %v395
    %v508 = vpop.f32.mrf.mxu0
    %v509 = vadd.f32 0.0, %v508
    %v510 = vpop.f32.mrf.mxu0
    %v511 = vadd.f32 0.0, %v510
    %512 = vmatmul.bf16.gmra.mxu0 %v398
    %v513 = vpop.f32.mrf.mxu0
    %v514 = vadd.f32 0.0, %v513
    %v515 = vpop.f32.mrf.mxu0
    %v516 = vadd.f32 0.0, %v515
    %517 = vmatmul.bf16.gmra.mxu0 %v401
    %v518 = vpop.f32.mrf.mxu0
    %v519 = vadd.f32 0.0, %v518
    %v520 = vpop.f32.mrf.mxu0
    %v521 = vadd.f32 0.0, %v520
    %522 = vmatmul.bf16.gmra.mxu0 %v404
    %v523 = vpop.f32.mrf.mxu0
    %v524 = vadd.f32 0.0, %v523
    %v525 = vpop.f32.mrf.mxu0
    %v526 = vadd.f32 0.0, %v525
    %527 = vmatmul.bf16.gmra.mxu0 %v407
    %v528 = vpop.f32.mrf.mxu0
    %v529 = vadd.f32 0.0, %v528
    %v530 = vpop.f32.mrf.mxu0
    %v531 = vadd.f32 0.0, %v530
    %532 = vmatmul.bf16.gmra.mxu0 %v410
    %v533 = vpop.f32.mrf.mxu0
    %v534 = vadd.f32 0.0, %v533
    %v535 = vpop.f32.mrf.mxu0
    %v536 = vadd.f32 0.0, %v535
    %537 = vmatmul.bf16.gmra.mxu0 %v413
    %v538 = vpop.f32.mrf.mxu0
    %v539 = vadd.f32 0.0, %v538
    %v540 = vpop.f32.mrf.mxu0
    %v541 = vadd.f32 0.0, %v540
    %542 = vmatmul.bf16.gmra.mxu0 %v416
    %v543 = vpop.f32.mrf.mxu0
    %v544 = vadd.f32 0.0, %v543
    %v545 = vpop.f32.mrf.mxu0
    %v546 = vadd.f32 0.0, %v545
    %547 = vmatmul.bf16.gmra.mxu0 %v419
    %v548 = vpop.f32.mrf.mxu0
    %v549 = vadd.f32 0.0, %v548
    %v550 = vpop.f32.mrf.mxu0
    %v551 = vadd.f32 0.0, %v550
    %552 = vmatmul.bf16.gmra.mxu0 %v422
    %v553 = vpop.f32.mrf.mxu0
    %v554 = vadd.f32 0.0, %v553
    %v555 = vpop.f32.mrf.mxu0
    %v556 = vadd.f32 0.0, %v555
    %557 = vmatmul.bf16.gmra.mxu0 %v425
    %v558 = vpop.f32.mrf.mxu0
    %v559 = vadd.f32 0.0, %v558
    %v560 = vpop.f32.mrf.mxu0
    %v561 = vadd.f32 0.0, %v560
    %562 = vmatmul.bf16.gmra.mxu0 %v428
    %v563 = vpop.f32.mrf.mxu0
    %v564 = vadd.f32 0.0, %v563
    %v565 = vpop.f32.mrf.mxu0
    %v566 = vadd.f32 0.0, %v565
    %567 = vmatmul.bf16.gmra.mxu0 %v431
    %v568 = vpop.f32.mrf.mxu0
    %v569 = vadd.f32 0.0, %v568
    %v570 = vpop.f32.mrf.mxu0
    %v571 = vadd.f32 0.0, %v570
    %572 = vmatmul.bf16.gmra.mxu0 %v434
    %v573 = vpop.f32.mrf.mxu0
    %v574 = vadd.f32 0.0, %v573
    %v575 = vpop.f32.mrf.mxu0
    %v576 = vadd.f32 0.0, %v575
    %577 = vmatmul.bf16.gmra.mxu0 %v437
    %v578 = vpop.f32.mrf.mxu0
    %v579 = vadd.f32 0.0, %v578
    %v580 = vpop.f32.mrf.mxu0
    %v581 = vadd.f32 0.0, %v580
    %582 = vmatmul.bf16.gmra.mxu0 %v440
    %v583 = vpop.f32.mrf.mxu0
    %v584 = vadd.f32 0.0, %v583
    %v585 = vpop.f32.mrf.mxu0
    %v586 = vadd.f32 0.0, %v585
    %587 = vmatmul.bf16.gmra.mxu0 %v443
    %v588 = vpop.f32.mrf.mxu0
    %v589 = vadd.f32 0.0, %v588
    %v590 = vpop.f32.mrf.mxu0
    %v591 = vadd.f32 0.0, %v590
    %592 = vmatmul.bf16.gmra.mxu0 %v446
    %v593 = vpop.f32.mrf.mxu0
    %v594 = vadd.f32 0.0, %v593
    %v595 = vpop.f32.mrf.mxu0
    %v596 = vadd.f32 0.0, %v595
    %597 = vmatmul.bf16.gmra.mxu0 %v449
    %v598 = vpop.f32.mrf.mxu0
    %v599 = vadd.f32 0.0, %v598
    %v600 = vpop.f32.mrf.mxu0
    %v601 = vadd.f32 0.0, %v600
    %602 = vmatmul.bf16.gmra.mxu0 %v452
    %v603 = vpop.f32.mrf.mxu0
    %v604 = vadd.f32 0.0, %v603
    %v605 = vpop.f32.mrf.mxu0
    %v606 = vadd.f32 0.0, %v605
    %607 = vmatmul.bf16.gmra.mxu0 %v455
    %v608 = vpop.f32.mrf.mxu0
    %v609 = vadd.f32 0.0, %v608
    %v610 = vpop.f32.mrf.mxu0
    %v611 = vadd.f32 0.0, %v610
    %612 = vmatmul.bf16.gmra.mxu0 %v458
    %v613 = vpop.f32.mrf.mxu0
    %v614 = vadd.f32 0.0, %v613
    %v615 = vpop.f32.mrf.mxu0
    %v616 = vadd.f32 0.0, %v615
    %617 = vmatmul.bf16.gmra.mxu0 %v461
    %v618 = vpop.f32.mrf.mxu0
    %v619 = vadd.f32 0.0, %v618
    %v620 = vpop.f32.mrf.mxu0
    %v621 = vadd.f32 0.0, %v620
    %622 = vmatmul.bf16.gmra.mxu0 %v464
    %v623 = vpop.f32.mrf.mxu0
    %v624 = vadd.f32 0.0, %v623
    %v625 = vpop.f32.mrf.mxu0
    %v626 = vadd.f32 0.0, %v625
    %627 = vmatmul.bf16.gmra.mxu0 %v467
    %v628 = vpop.f32.mrf.mxu0
    %v629 = vadd.f32 0.0, %v628
    %v630 = vpop.f32.mrf.mxu0
    %v631 = vadd.f32 0.0, %v630
    %632 = vmatmul.bf16.gmra.mxu0 %v470
    %v633 = vpop.f32.mrf.mxu0
    %v634 = vadd.f32 0.0, %v633
    %v635 = vpop.f32.mrf.mxu0
    %v636 = vadd.f32 0.0, %v635
    %637 = vmatmul.bf16.gmra.mxu0 %v473
    %v638 = vpop.f32.mrf.mxu0
    %v639 = vadd.f32 0.0, %v638
    %v640 = vpop.f32.mrf.mxu0
    %v641 = vadd.f32 0.0, %v640
    %642 = vmatmul.bf16.gmra.mxu0 %v476
    %v643 = vpop.f32.mrf.mxu0
    %v644 = vadd.f32 0.0, %v643
    %v645 = vpop.f32.mrf.mxu0
    %v646 = vadd.f32 0.0, %v645
    %647 = vmatmul.bf16.gmra.mxu0 %v479
    %v648 = vpop.f32.mrf.mxu0
    %v649 = vadd.f32 0.0, %v648
    %v650 = vpop.f32.mrf.mxu0
    %v651 = vadd.f32 0.0, %v650
    %652 = vmatmul.bf16.gmra.mxu0 %v482
    %v653 = vpop.f32.mrf.mxu0
    %v654 = vadd.f32 0.0, %v653
    %v655 = vpop.f32.mrf.mxu0
    %v656 = vadd.f32 0.0, %v655
    %657 = vmatmul.bf16.gmra.mxu0 %v485
    %v658 = vpop.f32.mrf.mxu0
    %v659 = vadd.f32 0.0, %v658
    %v660 = vpop.f32.mrf.mxu0
    %v661 = vadd.f32 0.0, %v660
    %662 = vdwg.mxu0
    %v663 = vadd.f32 %v87, %v504
    %v664 = vadd.f32 %v88, %v506
    %v665 = vadd.f32 %v89, %v509
    %v666 = vadd.f32 %v90, %v511
    %v667 = vadd.f32 %v91, %v514
    %v668 = vadd.f32 %v92, %v516
    %v669 = vadd.f32 %v93, %v519
    %v670 = vadd.f32 %v94, %v521
    %v671 = vadd.f32 %v95, %v524
    %v672 = vadd.f32 %v96, %v526
    %v673 = vadd.f32 %v97, %v529
    %v674 = vadd.f32 %v98, %v531
    %v675 = vadd.f32 %v99, %v534
    %v676 = vadd.f32 %v100, %v536
    %v677 = vadd.f32 %v101, %v539
    %v678 = vadd.f32 %v102, %v541
    %v679 = vadd.f32 %v103, %v544
    %v680 = vadd.f32 %v104, %v546
    %v681 = vadd.f32 %v105, %v549
    %v682 = vadd.f32 %v106, %v551
    %v683 = vadd.f32 %v107, %v554
    %v684 = vadd.f32 %v108, %v556
    %v685 = vadd.f32 %v109, %v559
    %v686 = vadd.f32 %v110, %v561
    %v687 = vadd.f32 %v111, %v564
    %v688 = vadd.f32 %v112, %v566
    %v689 = vadd.f32 %v113, %v569
    %v690 = vadd.f32 %v114, %v571
    %v691 = vadd.f32 %v115, %v574
    %v692 = vadd.f32 %v116, %v576
    %v693 = vadd.f32 %v117, %v579
    %v694 = vadd.f32 %v118, %v581
    %v695 = vadd.f32 %v119, %v584
    %v696 = vadd.f32 %v120, %v586
    %v697 = vadd.f32 %v121, %v589
    %v698 = vadd.f32 %v122, %v591
    %v699 = vadd.f32 %v123, %v594
    %v700 = vadd.f32 %v124, %v596
    %v701 = vadd.f32 %v125, %v599
    %v702 = vadd.f32 %v126, %v601
    %v703 = vadd.f32 %v127, %v604
    %v704 = vadd.f32 %v128, %v606
    %v705 = vadd.f32 %v129, %v609
    %v706 = vadd.f32 %v130, %v611
    %v707 = vadd.f32 %v131, %v614
    %v708 = vadd.f32 %v132, %v616
    %v709 = vadd.f32 %v133, %v619
    %v710 = vadd.f32 %v134, %v621
    %v711 = vadd.f32 %v135, %v624
    %v712 = vadd.f32 %v136, %v626
    %v713 = vadd.f32 %v137, %v629
    %v714 = vadd.f32 %v138, %v631
    %v715 = vadd.f32 %v139, %v634
    %v716 = vadd.f32 %v140, %v636
    %v717 = vadd.f32 %v141, %v639
    %v718 = vadd.f32 %v142, %v641
    %v719 = vadd.f32 %v143, %v644
    %v720 = vadd.f32 %v144, %v646
    %v721 = vadd.f32 %v145, %v649
    %v722 = vadd.f32 %v146, %v651
    %v723 = vadd.f32 %v147, %v654
    %v724 = vadd.f32 %v148, %v656
    %v725 = vadd.f32 %v149, %v659
    %v726 = vadd.f32 %v150, %v661
    %727 = vst [vmem:[#allocation2] sm:$0xff] %v663
    %728 = vst [vmem:[#allocation2 + $0x8] sm:$0xff] %v664
    %729 = vst [vmem:[#allocation2 + $0x10] sm:$0xff] %v665
    %730 = vst [vmem:[#allocation2 + $0x18] sm:$0xff] %v666
    %731 = vst [vmem:[#allocation2 + $0x20] sm:$0xff] %v667
    %732 = vst [vmem:[#allocation2 + $0x28] sm:$0xff] %v668
    %733 = vst [vmem:[#allocation2 + $0x30] sm:$0xff] %v669
    %734 = vst [vmem:[#allocation2 + $0x38] sm:$0xff] %v670
    %735 = vst [vmem:[#allocation2 + $0x40] sm:$0xff] %v671
    %736 = vst [vmem:[#allocation2 + $0x48] sm:$0xff] %v672
    %737 = vst [vmem:[#allocation2 + $0x50] sm:$0xff] %v673
    %738 = vst [vmem:[#allocation2 + $0x58] sm:$0xff] %v674
    %739 = vst [vmem:[#allocation2 + $0x60] sm:$0xff] %v675
    %740 = vst [vmem:[#allocation2 + $0x68] sm:$0xff] %v676
    %741 = vst [vmem:[#allocation2 + $0x70] sm:$0xff] %v677
    %742 = vst [vmem:[#allocation2 + $0x78] sm:$0xff] %v678
    %743 = vst [vmem:[#allocation2 + $0x80] sm:$0xff] %v679
    %744 = vst [vmem:[#allocation2 + $0x88] sm:$0xff] %v680
    %745 = vst [vmem:[#allocation2 + $0x90] sm:$0xff] %v681
    %746 = vst [vmem:[#allocation2 + $0x98] sm:$0xff] %v682
    %747 = vst [vmem:[#allocation2 + $0xa0] sm:$0xff] %v683
    %748 = vst [vmem:[#allocation2 + $0xa8] sm:$0xff] %v684
    %749 = vst [vmem:[#allocation2 + $0xb0] sm:$0xff] %v685
    %750 = vst [vmem:[#allocation2 + $0xb8] sm:$0xff] %v686
    %751 = vst [vmem:[#allocation2 + $0xc0] sm:$0xff] %v687
    %752 = vst [vmem:[#allocation2 + $0xc8] sm:$0xff] %v688
    %753 = vst [vmem:[#allocation2 + $0xd0] sm:$0xff] %v689
    %754 = vst [vmem:[#allocation2 + $0xd8] sm:$0xff] %v690
    %755 = vst [vmem:[#allocation2 + $0xe0] sm:$0xff] %v691
    %756 = vst [vmem:[#allocation2 + $0xe8] sm:$0xff] %v692
    %757 = vst [vmem:[#allocation2 + $0xf0] sm:$0xff] %v693
    %758 = vst [vmem:[#allocation2 + $0xf8] sm:$0xff] %v694
    %759 = vst [vmem:[#allocation2 + $0x100] sm:$0xff] %v695
    %760 = vst [vmem:[#allocation2 + $0x108] sm:$0xff] %v696
    %761 = vst [vmem:[#allocation2 + $0x110] sm:$0xff] %v697
    %762 = vst [vmem:[#allocation2 + $0x118] sm:$0xff] %v698
    %763 = vst [vmem:[#allocation2 + $0x120] sm:$0xff] %v699
    %764 = vst [vmem:[#allocation2 + $0x128] sm:$0xff] %v700
    %765 = vst [vmem:[#allocation2 + $0x130] sm:$0xff] %v701
    %766 = vst [vmem:[#allocation2 + $0x138] sm:$0xff] %v702
    %767 = vst [vmem:[#allocation2 + $0x140] sm:$0xff] %v703
    %768 = vst [vmem:[#allocation2 + $0x148] sm:$0xff] %v704
    %769 = vst [vmem:[#allocation2 + $0x150] sm:$0xff] %v705
    %770 = vst [vmem:[#allocation2 + $0x158] sm:$0xff] %v706
    %771 = vst [vmem:[#allocation2 + $0x160] sm:$0xff] %v707
    %772 = vst [vmem:[#allocation2 + $0x168] sm:$0xff] %v708
    %773 = vst [vmem:[#allocation2 + $0x170] sm:$0xff] %v709
    %774 = vst [vmem:[#allocation2 + $0x178] sm:$0xff] %v710
    %775 = vst [vmem:[#allocation2 + $0x180] sm:$0xff] %v711
    %776 = vst [vmem:[#allocation2 + $0x188] sm:$0xff] %v712
    %777 = vst [vmem:[#allocation2 + $0x190] sm:$0xff] %v713
    %778 = vst [vmem:[#allocation2 + $0x198] sm:$0xff] %v714
    %779 = vst [vmem:[#allocation2 + $0x1a0] sm:$0xff] %v715
    %780 = vst [vmem:[#allocation2 + $0x1a8] sm:$0xff] %v716
    %781 = vst [vmem:[#allocation2 + $0x1b0] sm:$0xff] %v717
    %782 = vst [vmem:[#allocation2 + $0x1b8] sm:$0xff] %v718
    %783 = vst [vmem:[#allocation2 + $0x1c0] sm:$0xff] %v719
    %784 = vst [vmem:[#allocation2 + $0x1c8] sm:$0xff] %v720
    %785 = vst [vmem:[#allocation2 + $0x1d0] sm:$0xff] %v721
    %786 = vst [vmem:[#allocation2 + $0x1d8] sm:$0xff] %v722
    %787 = vst [vmem:[#allocation2 + $0x1e0] sm:$0xff] %v723
    %788 = vst [vmem:[#allocation2 + $0x1e8] sm:$0xff] %v724
    %789 = vst [vmem:[#allocation2 + $0x1f0] sm:$0xff] %v725
    %790 = vst [vmem:[#allocation2 + $0x1f8] sm:$0xff] %v726
    // Predicated region
    $region22: #{tpu_custom_call.1} parent=1 // pred_check
      %p791 = pneg %p19
    $region23: #{tpu_custom_call.1} parent=1 // pred_check_branch
      %793 = sbr.rel (%p791) target = $region25
    $region24: #{tpu_custom_call.1} parent=1 // pred_region
      %v794 = vld [vmem:[#allocation2] sm:$0xff]
      %v795 = vld [vmem:[#allocation2 + $0x8] sm:$0xff]
      %v796 = vld [vmem:[#allocation2 + $0x10] sm:$0xff]
      %v797 = vld [vmem:[#allocation2 + $0x18] sm:$0xff]
      %v798 = vld [vmem:[#allocation2 + $0x20] sm:$0xff]
      %v799 = vld [vmem:[#allocation2 + $0x28] sm:$0xff]
      %v800 = vld [vmem:[#allocation2 + $0x30] sm:$0xff]
      %v801 = vld [vmem:[#allocation2 + $0x38] sm:$0xff]
      %v802 = vld [vmem:[#allocation2 + $0x40] sm:$0xff]
      %v803 = vld [vmem:[#allocation2 + $0x48] sm:$0xff]
      %v804 = vld [vmem:[#allocation2 + $0x50] sm:$0xff]
      %v805 = vld [vmem:[#allocation2 + $0x58] sm:$0xff]
      %v806 = vld [vmem:[#allocation2 + $0x60] sm:$0xff]
      %v807 = vld [vmem:[#allocation2 + $0x68] sm:$0xff]
      %v808 = vld [vmem:[#allocation2 + $0x70] sm:$0xff]
      %v809 = vld [vmem:[#allocation2 + $0x78] sm:$0xff]
      %v810 = vld [vmem:[#allocation2 + $0x80] sm:$0xff]
      %v811 = vld [vmem:[#allocation2 + $0x88] sm:$0xff]
      %v812 = vld [vmem:[#allocation2 + $0x90] sm:$0xff]
      %v813 = vld [vmem:[#allocation2 + $0x98] sm:$0xff]
      %v814 = vld [vmem:[#allocation2 + $0xa0] sm:$0xff]
      %v815 = vld [vmem:[#allocation2 + $0xa8] sm:$0xff]
      %v816 = vld [vmem:[#allocation2 + $0xb0] sm:$0xff]
      %v817 = vld [vmem:[#allocation2 + $0xb8] sm:$0xff]
      %v818 = vld [vmem:[#allocation2 + $0xc0] sm:$0xff]
      %v819 = vld [vmem:[#allocation2 + $0xc8] sm:$0xff]
      %v820 = vld [vmem:[#allocation2 + $0xd0] sm:$0xff]
      %v821 = vld [vmem:[#allocation2 + $0xd8] sm:$0xff]
      %v822 = vld [vmem:[#allocation2 + $0xe0] sm:$0xff]
      %v823 = vld [vmem:[#allocation2 + $0xe8] sm:$0xff]
      %v824 = vld [vmem:[#allocation2 + $0xf0] sm:$0xff]
      %v825 = vld [vmem:[#allocation2 + $0xf8] sm:$0xff]
      %v826 = vld [vmem:[#allocation2 + $0x100] sm:$0xff]
      %v827 = vld [vmem:[#allocation2 + $0x108] sm:$0xff]
      %v828 = vld [vmem:[#allocation2 + $0x110] sm:$0xff]
      %v829 = vld [vmem:[#allocation2 + $0x118] sm:$0xff]
      %v830 = vld [vmem:[#allocation2 + $0x120] sm:$0xff]
      %v831 = vld [vmem:[#allocation2 + $0x128] sm:$0xff]
      %v832 = vld [vmem:[#allocation2 + $0x130] sm:$0xff]
      %v833 = vld [vmem:[#allocation2 + $0x138] sm:$0xff]
      %v834 = vld [vmem:[#allocation2 + $0x140] sm:$0xff]
      %v835 = vld [vmem:[#allocation2 + $0x148] sm:$0xff]
      %v836 = vld [vmem:[#allocation2 + $0x150] sm:$0xff]
      %v837 = vld [vmem:[#allocation2 + $0x158] sm:$0xff]
      %v838 = vld [vmem:[#allocation2 + $0x160] sm:$0xff]
      %v839 = vld [vmem:[#allocation2 + $0x168] sm:$0xff]
      %v840 = vld [vmem:[#allocation2 + $0x170] sm:$0xff]
      %v841 = vld [vmem:[#allocation2 + $0x178] sm:$0xff]
      %v842 = vld [vmem:[#allocation2 + $0x180] sm:$0xff]
      %v843 = vld [vmem:[#allocation2 + $0x188] sm:$0xff]
      %v844 = vld [vmem:[#allocation2 + $0x190] sm:$0xff]
      %v845 = vld [vmem:[#allocation2 + $0x198] sm:$0xff]
      %v846 = vld [vmem:[#allocation2 + $0x1a0] sm:$0xff]
      %v847 = vld [vmem:[#allocation2 + $0x1a8] sm:$0xff]
      %v848 = vld [vmem:[#allocation2 + $0x1b0] sm:$0xff]
      %v849 = vld [vmem:[#allocation2 + $0x1b8] sm:$0xff]
      %v850 = vld [vmem:[#allocation2 + $0x1c0] sm:$0xff]
      %v851 = vld [vmem:[#allocation2 + $0x1c8] sm:$0xff]
      %v852 = vld [vmem:[#allocation2 + $0x1d0] sm:$0xff]
      %v853 = vld [vmem:[#allocation2 + $0x1d8] sm:$0xff]
      %v854 = vld [vmem:[#allocation2 + $0x1e0] sm:$0xff]
      %v855 = vld [vmem:[#allocation2 + $0x1e8] sm:$0xff]
      %v856 = vld [vmem:[#allocation2 + $0x1f0] sm:$0xff]
      %v857 = vld [vmem:[#allocation2 + $0x1f8] sm:$0xff]
      %v858 = vld [vmem:[%s2] sm:$0x1]
      %v860 = vperm.slane %v858, 0
      %v862 = vmul.f32 %v794, %v860
      %v863 = vmul.f32 %v795, %v860
      %v864 = vmul.f32 %v796, %v860
      %v865 = vmul.f32 %v797, %v860
      %v866 = vmul.f32 %v798, %v860
      %v867 = vmul.f32 %v799, %v860
      %v868 = vmul.f32 %v800, %v860
      %v869 = vmul.f32 %v801, %v860
      %v870 = vmul.f32 %v802, %v860
      %v871 = vmul.f32 %v803, %v860
      %v872 = vmul.f32 %v804, %v860
      %v873 = vmul.f32 %v805, %v860
      %v874 = vmul.f32 %v806, %v860
      %v875 = vmul.f32 %v807, %v860
      %v876 = vmul.f32 %v808, %v860
      %v877 = vmul.f32 %v809, %v860
      %v878 = vmul.f32 %v810, %v860
      %v879 = vmul.f32 %v811, %v860
      %v880 = vmul.f32 %v812, %v860
      %v881 = vmul.f32 %v813, %v860
      %v882 = vmul.f32 %v814, %v860
      %v883 = vmul.f32 %v815, %v860
      %v884 = vmul.f32 %v816, %v860
      %v885 = vmul.f32 %v817, %v860
      %v886 = vmul.f32 %v818, %v860
      %v887 = vmul.f32 %v819, %v860
      %v888 = vmul.f32 %v820, %v860
      %v889 = vmul.f32 %v821, %v860
      %v890 = vmul.f32 %v822, %v860
      %v891 = vmul.f32 %v823, %v860
      %v892 = vmul.f32 %v824, %v860
      %v893 = vmul.f32 %v825, %v860
      %v894 = vmul.f32 %v826, %v860
      %v895 = vmul.f32 %v827, %v860
      %v896 = vmul.f32 %v828, %v860
      %v897 = vmul.f32 %v829, %v860
      %v898 = vmul.f32 %v830, %v860
      %v899 = vmul.f32 %v831, %v860
      %v900 = vmul.f32 %v832, %v860
      %v901 = vmul.f32 %v833, %v860
      %v902 = vmul.f32 %v834, %v860
      %v903 = vmul.f32 %v835, %v860
      %v904 = vmul.f32 %v836, %v860
      %v905 = vmul.f32 %v837, %v860
      %v906 = vmul.f32 %v838, %v860
      %v907 = vmul.f32 %v839, %v860
      %v908 = vmul.f32 %v840, %v860
      %v909 = vmul.f32 %v841, %v860
      %v910 = vmul.f32 %v842, %v860
      %v911 = vmul.f32 %v843, %v860
      %v912 = vmul.f32 %v844, %v860
      %v913 = vmul.f32 %v845, %v860
      %v914 = vmul.f32 %v846, %v860
      %v915 = vmul.f32 %v847, %v860
      %v916 = vmul.f32 %v848, %v860
      %v917 = vmul.f32 %v849, %v860
      %v918 = vmul.f32 %v850, %v860
      %v919 = vmul.f32 %v851, %v860
      %v920 = vmul.f32 %v852, %v860
      %v921 = vmul.f32 %v853, %v860
      %v922 = vmul.f32 %v854, %v860
      %v923 = vmul.f32 %v855, %v860
      %v924 = vmul.f32 %v856, %v860
      %v925 = vmul.f32 %v857, %v860
      %v926 = vld [vmem:[%s3] sm:$0x1]
      %v928 = vperm.slane %v926, 0
      %v930 = vadd.f32 %v862, %v928
      %v931 = vadd.f32 %v863, %v928
      %v932 = vadd.f32 %v864, %v928
      %v933 = vadd.f32 %v865, %v928
      %v934 = vadd.f32 %v866, %v928
      %v935 = vadd.f32 %v867, %v928
      %v936 = vadd.f32 %v868, %v928
      %v937 = vadd.f32 %v869, %v928
      %v938 = vadd.f32 %v870, %v928
      %v939 = vadd.f32 %v871, %v928
      %v940 = vadd.f32 %v872, %v928
      %v941 = vadd.f32 %v873, %v928
      %v942 = vadd.f32 %v874, %v928
      %v943 = vadd.f32 %v875, %v928
      %v944 = vadd.f32 %v876, %v928
      %v945 = vadd.f32 %v877, %v928
      %v946 = vadd.f32 %v878, %v928
      %v947 = vadd.f32 %v879, %v928
      %v948 = vadd.f32 %v880, %v928
      %v949 = vadd.f32 %v881, %v928
      %v950 = vadd.f32 %v882, %v928
      %v951 = vadd.f32 %v883, %v928
      %v952 = vadd.f32 %v884, %v928
      %v953 = vadd.f32 %v885, %v928
      %v954 = vadd.f32 %v886, %v928
      %v955 = vadd.f32 %v887, %v928
      %v956 = vadd.f32 %v888, %v928
      %v957 = vadd.f32 %v889, %v928
      %v958 = vadd.f32 %v890, %v928
      %v959 = vadd.f32 %v891, %v928
      %v960 = vadd.f32 %v892, %v928
      %v961 = vadd.f32 %v893, %v928
      %v962 = vadd.f32 %v894, %v928
      %v963 = vadd.f32 %v895, %v928
      %v964 = vadd.f32 %v896, %v928
      %v965 = vadd.f32 %v897, %v928
      %v966 = vadd.f32 %v898, %v928
      %v967 = vadd.f32 %v899, %v928
      %v968 = vadd.f32 %v900, %v928
      %v969 = vadd.f32 %v901, %v928
      %v970 = vadd.f32 %v902, %v928
      %v971 = vadd.f32 %v903, %v928
      %v972 = vadd.f32 %v904, %v928
      %v973 = vadd.f32 %v905, %v928
      %v974 = vadd.f32 %v906, %v928
      %v975 = vadd.f32 %v907, %v928
      %v976 = vadd.f32 %v908, %v928
      %v977 = vadd.f32 %v909, %v928
      %v978 = vadd.f32 %v910, %v928
      %v979 = vadd.f32 %v911, %v928
      %v980 = vadd.f32 %v912, %v928
      %v981 = vadd.f32 %v913, %v928
      %v982 = vadd.f32 %v914, %v928
      %v983 = vadd.f32 %v915, %v928
      %v984 = vadd.f32 %v916, %v928
      %v985 = vadd.f32 %v917, %v928
      %v986 = vadd.f32 %v918, %v928
      %v987 = vadd.f32 %v919, %v928
      %v988 = vadd.f32 %v920, %v928
      %v989 = vadd.f32 %v921, %v928
      %v990 = vadd.f32 %v922, %v928
      %v991 = vadd.f32 %v923, %v928
      %v992 = vadd.f32 %v924, %v928
      %v993 = vadd.f32 %v925, %v928
      %v994 = vmax.f32 %v930, 0.0
      %v995 = vmax.f32 %v931, 0.0
      %v996 = vmax.f32 %v932, 0.0
      %v997 = vmax.f32 %v933, 0.0
      %v998 = vmax.f32 %v934, 0.0
      %v999 = vmax.f32 %v935, 0.0
      %v1000 = vmax.f32 %v936, 0.0
      %v1001 = vmax.f32 %v937, 0.0
      %v1002 = vmax.f32 %v938, 0.0
      %v1003 = vmax.f32 %v939, 0.0
      %v1004 = vmax.f32 %v940, 0.0
      %v1005 = vmax.f32 %v941, 0.0
      %v1006 = vmax.f32 %v942, 0.0
      %v1007 = vmax.f32 %v943, 0.0
      %v1008 = vmax.f32 %v944, 0.0
      %v1009 = vmax.f32 %v945, 0.0
      %v1010 = vmax.f32 %v946, 0.0
      %v1011 = vmax.f32 %v947, 0.0
      %v1012 = vmax.f32 %v948, 0.0
      %v1013 = vmax.f32 %v949, 0.0
      %v1014 = vmax.f32 %v950, 0.0
      %v1015 = vmax.f32 %v951, 0.0
      %v1016 = vmax.f32 %v952, 0.0
      %v1017 = vmax.f32 %v953, 0.0
      %v1018 = vmax.f32 %v954, 0.0
      %v1019 = vmax.f32 %v955, 0.0
      %v1020 = vmax.f32 %v956, 0.0
      %v1021 = vmax.f32 %v957, 0.0
      %v1022 = vmax.f32 %v958, 0.0
      %v1023 = vmax.f32 %v959, 0.0
      %v1024 = vmax.f32 %v960, 0.0
      %v1025 = vmax.f32 %v961, 0.0
      %v1026 = vmax.f32 %v962, 0.0
      %v1027 = vmax.f32 %v963, 0.0
      %v1028 = vmax.f32 %v964, 0.0
      %v1029 = vmax.f32 %v965, 0.0
      %v1030 = vmax.f32 %v966, 0.0
      %v1031 = vmax.f32 %v967, 0.0
      %v1032 = vmax.f32 %v968, 0.0
      %v1033 = vmax.f32 %v969, 0.0
      %v1034 = vmax.f32 %v970, 0.0
      %v1035 = vmax.f32 %v971, 0.0
      %v1036 = vmax.f32 %v972, 0.0
      %v1037 = vmax.f32 %v973, 0.0
      %v1038 = vmax.f32 %v974, 0.0
      %v1039 = vmax.f32 %v975, 0.0
      %v1040 = vmax.f32 %v976, 0.0
      %v1041 = vmax.f32 %v977, 0.0
      %v1042 = vmax.f32 %v978, 0.0
      %v1043 = vmax.f32 %v979, 0.0
      %v1044 = vmax.f32 %v980, 0.0
      %v1045 = vmax.f32 %v981, 0.0
      %v1046 = vmax.f32 %v982, 0.0
      %v1047 = vmax.f32 %v983, 0.0
      %v1048 = vmax.f32 %v984, 0.0
      %v1049 = vmax.f32 %v985, 0.0
      %v1050 = vmax.f32 %v986, 0.0
      %v1051 = vmax.f32 %v987, 0.0
      %v1052 = vmax.f32 %v988, 0.0
      %v1053 = vmax.f32 %v989, 0.0
      %v1054 = vmax.f32 %v990, 0.0
      %v1055 = vmax.f32 %v991, 0.0
      %v1056 = vmax.f32 %v992, 0.0
      %v1057 = vmax.f32 %v993, 0.0
      %1058 = vst [vmem:[#allocation3] sm:$0xff] %v994
      %1059 = vst [vmem:[#allocation3 + $0x8] sm:$0xff] %v995
      %1060 = vst [vmem:[#allocation3 + $0x10] sm:$0xff] %v996
      %1061 = vst [vmem:[#allocation3 + $0x18] sm:$0xff] %v997
      %1062 = vst [vmem:[#allocation3 + $0x20] sm:$0xff] %v998
      %1063 = vst [vmem:[#allocation3 + $0x28] sm:$0xff] %v999
      %1064 = vst [vmem:[#allocation3 + $0x30] sm:$0xff] %v1000
      %1065 = vst [vmem:[#allocation3 + $0x38] sm:$0xff] %v1001
      %1066 = vst [vmem:[#allocation3 + $0x40] sm:$0xff] %v1002
      %1067 = vst [vmem:[#allocation3 + $0x48] sm:$0xff] %v1003
      %1068 = vst [vmem:[#allocation3 + $0x50] sm:$0xff] %v1004
      %1069 = vst [vmem:[#allocation3 + $0x58] sm:$0xff] %v1005
      %1070 = vst [vmem:[#allocation3 + $0x60] sm:$0xff] %v1006
      %1071 = vst [vmem:[#allocation3 + $0x68] sm:$0xff] %v1007
      %1072 = vst [vmem:[#allocation3 + $0x70] sm:$0xff] %v1008
      %1073 = vst [vmem:[#allocation3 + $0x78] sm:$0xff] %v1009
      %1074 = vst [vmem:[#allocation3 + $0x80] sm:$0xff] %v1010
      %1075 = vst [vmem:[#allocation3 + $0x88] sm:$0xff] %v1011
      %1076 = vst [vmem:[#allocation3 + $0x90] sm:$0xff] %v1012
      %1077 = vst [vmem:[#allocation3 + $0x98] sm:$0xff] %v1013
      %1078 = vst [vmem:[#allocation3 + $0xa0] sm:$0xff] %v1014
      %1079 = vst [vmem:[#allocation3 + $0xa8] sm:$0xff] %v1015
      %1080 = vst [vmem:[#allocation3 + $0xb0] sm:$0xff] %v1016
      %1081 = vst [vmem:[#allocation3 + $0xb8] sm:$0xff] %v1017
      %1082 = vst [vmem:[#allocation3 + $0xc0] sm:$0xff] %v1018
      %1083 = vst [vmem:[#allocation3 + $0xc8] sm:$0xff] %v1019
      %1084 = vst [vmem:[#allocation3 + $0xd0] sm:$0xff] %v1020
      %1085 = vst [vmem:[#allocation3 + $0xd8] sm:$0xff] %v1021
      %1086 = vst [vmem:[#allocation3 + $0xe0] sm:$0xff] %v1022
      %1087 = vst [vmem:[#allocation3 + $0xe8] sm:$0xff] %v1023
      %1088 = vst [vmem:[#allocation3 + $0xf0] sm:$0xff] %v1024
      %1089 = vst [vmem:[#allocation3 + $0xf8] sm:$0xff] %v1025
      %1090 = vst [vmem:[#allocation3 + $0x100] sm:$0xff] %v1026
      %1091 = vst [vmem:[#allocation3 + $0x108] sm:$0xff] %v1027
      %1092 = vst [vmem:[#allocation3 + $0x110] sm:$0xff] %v1028
      %1093 = vst [vmem:[#allocation3 + $0x118] sm:$0xff] %v1029
      %1094 = vst [vmem:[#allocation3 + $0x120] sm:$0xff] %v1030
      %1095 = vst [vmem:[#allocation3 + $0x128] sm:$0xff] %v1031
      %1096 = vst [vmem:[#allocation3 + $0x130] sm:$0xff] %v1032
      %1097 = vst [vmem:[#allocation3 + $0x138] sm:$0xff] %v1033
      %1098 = vst [vmem:[#allocation3 + $0x140] sm:$0xff] %v1034
      %1099 = vst [vmem:[#allocation3 + $0x148] sm:$0xff] %v1035
      %1100 = vst [vmem:[#allocation3 + $0x150] sm:$0xff] %v1036
      %1101 = vst [vmem:[#allocation3 + $0x158] sm:$0xff] %v1037
      %1102 = vst [vmem:[#allocation3 + $0x160] sm:$0xff] %v1038
      %1103 = vst [vmem:[#allocation3 + $0x168] sm:$0xff] %v1039
      %1104 = vst [vmem:[#allocation3 + $0x170] sm:$0xff] %v1040
      %1105 = vst [vmem:[#allocation3 + $0x178] sm:$0xff] %v1041
      %1106 = vst [vmem:[#allocation3 + $0x180] sm:$0xff] %v1042
      %1107 = vst [vmem:[#allocation3 + $0x188] sm:$0xff] %v1043
      %1108 = vst [vmem:[#allocation3 + $0x190] sm:$0xff] %v1044
      %1109 = vst [vmem:[#allocation3 + $0x198] sm:$0xff] %v1045
      %1110 = vst [vmem:[#allocation3 + $0x1a0] sm:$0xff] %v1046
      %1111 = vst [vmem:[#allocation3 + $0x1a8] sm:$0xff] %v1047
      %1112 = vst [vmem:[#allocation3 + $0x1b0] sm:$0xff] %v1048
      %1113 = vst [vmem:[#allocation3 + $0x1b8] sm:$0xff] %v1049
      %1114 = vst [vmem:[#allocation3 + $0x1c0] sm:$0xff] %v1050
      %1115 = vst [vmem:[#allocation3 + $0x1c8] sm:$0xff] %v1051
      %1116 = vst [vmem:[#allocation3 + $0x1d0] sm:$0xff] %v1052
      %1117 = vst [vmem:[#allocation3 + $0x1d8] sm:$0xff] %v1053
      %1118 = vst [vmem:[#allocation3 + $0x1e0] sm:$0xff] %v1054
      %1119 = vst [vmem:[#allocation3 + $0x1e8] sm:$0xff] %v1055
      %1120 = vst [vmem:[#allocation3 + $0x1f0] sm:$0xff] %v1056
      %1121 = vst [vmem:[#allocation3 + $0x1f8] sm:$0xff] %v1057
    $region25: #{tpu_custom_call.1} parent=1 // pred_fallthru
      _
    // Predicated region
    $region26: #{tpu_custom_call.1} parent=1 // pred_check
      _
    $region27: #{tpu_custom_call.1} parent=1 // pred_check_branch
      %1123 = sbr.rel (0) target = $region29
    $region28: #{tpu_custom_call.1} parent=1 // pred_region
      %1125 = vsyncadd [#allocation4], 0
      %s1126 = sshll.u32 [#allocation3], 4
      %s1127 = int_to_ptr.vmem [resolvable:$true] %s1126
      %s1128 = sshll.u32 %s4, 4
      %s1129 = int_to_ptr.hbm [resolvable:$true] %s1128
      %1134 = dma.vmem_to_hbm [thread:$0]  %s1127, 8192, %s1129, [#allocation4], 128, 128, 8
    $region29: #{tpu_custom_call.1} parent=1 // pred_fallthru
      _
    // Predicated region
    $region30: #{tpu_custom_call.1} parent=1 // pred_check
      _
    $region31: #{tpu_custom_call.1} parent=1 // pred_check_branch
      %1136 = sbr.rel (0) target = $region33
    $region32: #{tpu_custom_call.1} parent=1 // pred_region
      %1138 = dma.done [#allocation4], 8192
    $region33: #{tpu_custom_call.1} parent=1 // pred_fallthru
      _
    %1139 = vsyncpa [#allocation4], 1

</llo_original>
